<compile_context>
chip_gen: v7x
topology: tpu7x:2x2x1
jax: 0.10.0
libtpu: 0.0.40
codegen_flags: <defaults>
</compile_context>

<pallas_src>
import jax
import jax.numpy as jnp
from jax.experimental import pallas as pl
from jax.experimental.pallas import tpu as pltpu


def _make_cell_kernel(N, H, W, Rp, nce, conv_row_starts, conv_inner_only,
                      p3_row, p5_row):
    """Build a kernel specialized (at trace time) on the static geometry and
    on how ops share their source tensors.

    SMEM scalar layout (single packed f32 vector):
      [0             : 25*nce)  per-conv-entry 25-tap kernels (row-major 5x5)
      [25*nce       ]           total conv bias  (w0*b3 + w1*b5)
      [25*nce + 1   ]           pool3 mixing weight (w2)
      [25*nce + 2   ]           pool5 mixing weight (w3)
    VMEM input : stacked sources, (Rp, H*W) f32 (conv rows, pool3 rows,
                 pool5 rows, zero-padded to a multiple of 8 sublanes).
    VMEM output: (N, H*W) f32.
    """
    HW = H * W
    NEG = float("-inf")                       # Python literal: not captured
    w_pow2 = (W & (W - 1)) == 0
    log2w = W.bit_length() - 1

    def kernel(scal_ref, x_ref, o_ref):
        xs = x_ref[...]                                     # (Rp, HW), one load

        # Lane coordinates of every pixel in the flattened layout.
        flat = jax.lax.broadcasted_iota(jnp.int32, (Rp, HW), 1)
        jj = (flat & (W - 1)) if w_pow2 else (flat % W)     # column index
        # Row validity can be tested on `flat` directly: ii >= a <=> flat >= a*W.

        # Rows belonging to the 5x5 pool entry (the only rows that participate
        # in the outer ring of taps). Computed once, reused for 16 outer taps.
        row = jax.lax.broadcasted_iota(jnp.int32, (Rp, 1), 0)
        is_p5_row = jnp.logical_and(row >= p5_row, row < p5_row + N)

        c_accs = [jnp.zeros((Rp, HW), jnp.float32) for _ in range(nce)]
        m_acc = jnp.full((Rp, HW), NEG, jnp.float32)

        # One shared 5x5 tap sweep; each tap rolls the *stacked* sources once.
        for dh in range(5):
            for dw in range(5):
                oh, ow = dh - 2, dw - 2
                s = oh * W + ow
                inner = (1 <= dh <= 3) and (1 <= dw <= 3)

                # out[p] = x[(p + s) mod HW]; out-of-image taps masked below.
                rolled = xs if s == 0 else pltpu.roll(xs, shift=(-s) % HW, axis=1)

                # Boundary mask; trivially-true comparisons are dropped.
                ms = []
                if oh < 0:
                    ms.append(flat >= (-oh) * W)
                elif oh > 0:
                    ms.append(flat < (H - oh) * W)
                if ow < 0:
                    ms.append(jj >= -ow)
                elif ow > 0:
                    ms.append(jj < W - ow)
                if not ms:
                    valid = None
                elif len(ms) == 1:
                    valid = ms[0]
                else:
                    valid = jnp.logical_and(ms[0], ms[1])

                # Conv taps: zero outside the image (pool rows accumulate
                # garbage here but are never read back).
                vconv = rolled if valid is None else jnp.where(valid, rolled, 0.0)
                for e in range(nce):
                    if conv_inner_only[e] and not inner:
                        continue      # embedded 3x3 kernel: outer taps are zero
                    c_accs[e] = c_accs[e] + scal_ref[25 * e + 5 * dh + dw] * vconv

                # Max-pool taps: -inf outside the image; on the outer ring only
                # the pool5 rows participate.
                if inner:
                    vpool = rolled if valid is None else jnp.where(valid, rolled, NEG)
                else:
                    pm = is_p5_row if valid is None else jnp.logical_and(valid, is_p5_row)
                    vpool = jnp.where(pm, rolled, NEG)
                m_acc = jnp.maximum(m_acc, vpool)

        bias = scal_ref[25 * nce]
        w2 = scal_ref[25 * nce + 1]
        w3 = scal_ref[25 * nce + 2]

        # Split rows only once, at the very end.
        conv = c_accs[0][conv_row_starts[0]:conv_row_starts[0] + N]
        for e in range(1, nce):
            conv = conv + c_accs[e][conv_row_starts[e]:conv_row_starts[e] + N]
        m3 = m_acc[p3_row:p3_row + N]
        m5 = m_acc[p5_row:p5_row + N]

        o_ref[...] = conv + bias + w2 * m3 + w3 * m5

    return kernel


def cell_forward(x_prev, x_curr, weights, k3, b3, k5, b5):
    """x_prev, x_curr: (N, 1, H, W) float32. Returns (N, 1, H, W)."""
    n_ops = 4
    n_prev = x_prev.shape[0]                  # PyTorch: len(tensor) == batch dim
    srcs = [x_prev if i < n_prev else x_curr for i in range(n_ops)]

    N, C, H, W = x_prev.shape
    assert C == 1 and x_curr.shape == x_prev.shape
    HW = H * W

    w = weights.astype(jnp.float32)
    k3s = (w[0] * k3.reshape(3, 3)).astype(jnp.float32)
    k5s = (w[1] * k5.reshape(5, 5)).astype(jnp.float32)
    bias_total = w[0] * b3[0] + w[1] * b5[0]

    # Conv entries: if both convs read the same tensor they merge into a single
    # 5x5 kernel (scalar-folded), otherwise ship two tap sets.
    if srcs[0] is srcs[1]:
        km = k5s.at[1:4, 1:4].add(k3s)
        conv_entries = [(srcs[0], km.reshape(-1), False)]
    else:
        k3e = jnp.zeros((5, 5), jnp.float32).at[1:4, 1:4].set(k3s)
        conv_entries = [(srcs[0], k3e.reshape(-1), True),
                        (srcs[1], k5s.reshape(-1), False)]
    nce = len(conv_entries)

    # Stack all sources along the sublane axis: conv entries, pool3, pool5.
    entry_srcs = [e[0] for e in conv_entries] + [srcs[2], srcs[3]]
    R = len(entry_srcs) * N
    Rp = ((R + 7) // 8) * 8                   # pad sublanes to a full (8,128) tile

    stacked = jnp.concatenate(
        [s[:, 0, :, :].reshape(N, HW).astype(jnp.float32) for s in entry_srcs],
        axis=0)
    if Rp > R:
        stacked = jnp.concatenate(
            [stacked, jnp.zeros((Rp - R, HW), jnp.float32)], axis=0)

    # Single packed SMEM scalar argument: taps | bias | w2 | w3.
    scal = jnp.concatenate(
        [e[1] for e in conv_entries] + [jnp.stack([bias_total, w[2], w[3]])]
    ).astype(jnp.float32)

    conv_row_starts = tuple(i * N for i in range(nce))
    conv_inner_only = tuple(e[2] for e in conv_entries)
    p3_row = nce * N
    p5_row = (nce + 1) * N

    kernel = _make_cell_kernel(N, H, W, Rp, nce, conv_row_starts,
                               conv_inner_only, p3_row, p5_row)

    out = pl.pallas_call(
        kernel,
        out_shape=jax.ShapeDtypeStruct((N, HW), jnp.float32),
        in_specs=[pl.BlockSpec(memory_space=pltpu.MemorySpace.SMEM),
                  pl.BlockSpec(memory_space=pltpu.MemorySpace.VMEM)],
        out_specs=pl.BlockSpec(memory_space=pltpu.MemorySpace.VMEM),
    )(scal, stacked)

    return out.reshape(N, 1, H, W)


def cell_reference(x_prev, x_curr, weights, k3, b3, k5, b5):
    """Pure-JAX reference mirroring the PyTorch forward exactly."""
    n_prev = x_prev.shape[0]
    srcs = [x_prev if i < n_prev else x_curr for i in range(4)]

    def conv(x, k, b, pad):
        y = jax.lax.conv_general_dilated(
            x, k, (1, 1), [(pad, pad), (pad, pad)],
            dimension_numbers=('NCHW', 'OIHW', 'NCHW'))
        return y + b.reshape(1, -1, 1, 1)

    def pool(x, size, pad):
        return jax.lax.reduce_window(
            x, -jnp.inf, jax.lax.max,
            (1, 1, size, size), (1, 1, 1, 1),
            [(0, 0), (0, 0), (pad, pad), (pad, pad)])

    return (weights[0] * conv(srcs[0], k3, b3, 1)
            + weights[1] * conv(srcs[1], k5, b5, 2)
            + weights[2] * pool(srcs[2], 3, 1)
            + weights[3] * pool(srcs[3], 5, 2))


if __name__ == "__main__":
    key = jax.random.PRNGKey(0)
    ks = jax.random.split(key, 7)
    N, C, H, W = 2, 1, 16, 16

    x_prev = jax.random.normal(ks[0], (N, C, H, W), jnp.float32)
    x_curr = jax.random.normal(ks[1], (N, C, H, W), jnp.float32)

    # deterministic "parameters" (module __init__: weights = randn(num_ops);
    # conv3x3 / conv5x5 each have a (1,1,k,k) weight and (1,) bias)
    weights = jax.random.normal(ks[2], (4,), jnp.float32)
    k3 = jax.random.normal(ks[3], (1, 1, 3, 3), jnp.float32) * 0.3
    b3 = jax.random.normal(ks[4], (1,), jnp.float32) * 0.1
    k5 = jax.random.normal(ks[5], (1, 1, 5, 5), jnp.float32) * 0.2
    b5 = jax.random.normal(ks[6], (1,), jnp.float32) * 0.1

    out = cell_forward(x_prev, x_curr, weights, k3, b3, k5, b5)
    out = jax.block_until_ready(out)

    ref = cell_reference(x_prev, x_curr, weights, k3, b3, k5, b5)
    assert out.shape == (N, C, H, W), out.shape
    assert jnp.allclose(out, ref, atol=1e-4, rtol=1e-4), \
        float(jnp.max(jnp.abs(out - ref)))

    print("KERNEL_OK")
</pallas_src>

<mosaic_0001>
module attributes {stable_mosaic.version = 11 : i64} {
  func.func @kernel(%arg0: memref<28xf32, #tpu.memory_space<smem>>, %arg1: memref<8x256xf32, #tpu.memory_space<vmem>>, %arg2: memref<2x256xf32, #tpu.memory_space<vmem>>) attributes {dimension_semantics = [], scalar_prefetch = 0 : i64, scratch_operands = 0 : i64, tpu.core_type = #tpu.core_type<tc>} {
    %c0 = arith.constant 0 : index
    %c0_0 = arith.constant 0 : index
    %0 = vector.load %arg1[%c0, %c0_0] : memref<8x256xf32, #tpu.memory_space<vmem>>, vector<8x256xf32>
    %1 = tpu.iota {dimensions = array<i32: 1>} : vector<8x256xi32>
    %c15_i32 = arith.constant 15 : i32
    %2 = vector.broadcast %c15_i32 : i32 to vector<8x256xi32>
    %3 = arith.andi %1, %2 : vector<8x256xi32>
    %4 = tpu.iota {dimensions = array<i32: 0>} : vector<8x1xi32>
    %c4_i32 = arith.constant 4 : i32
    %5 = vector.broadcast %c4_i32 : i32 to vector<8x1xi32>
    %6 = arith.cmpi sge, %4, %5 : vector<8x1xi32>
    %c6_i32 = arith.constant 6 : i32
    %7 = vector.broadcast %c6_i32 : i32 to vector<8x1xi32>
    %8 = arith.cmpi slt, %4, %7 : vector<8x1xi32>
    %9 = arith.andi %6, %8 : vector<8x1xi1>
    %cst = arith.constant 0.000000e+00 : f32
    %10 = vector.broadcast %cst : f32 to vector<8x256xf32>
    %cst_1 = arith.constant 0xFF800000 : f32
    %11 = vector.broadcast %cst_1 : f32 to vector<8x256xf32>
    %c34_i32 = arith.constant 34 : i32
    %12 = tpu.dynamic_rotate %0 by %c34_i32 dim 1 : vector<8x256xf32>, i32 -> vector<8x256xf32>
    %c32_i32 = arith.constant 32 : i32
    %13 = vector.broadcast %c32_i32 : i32 to vector<8x256xi32>
    %14 = arith.cmpi sge, %1, %13 : vector<8x256xi32>
    %c2_i32 = arith.constant 2 : i32
    %15 = vector.broadcast %c2_i32 : i32 to vector<8x256xi32>
    %16 = arith.cmpi sge, %3, %15 : vector<8x256xi32>
    %17 = arith.andi %14, %16 : vector<8x256xi1>
    %cst_2 = arith.constant 0.000000e+00 : f32
    %18 = vector.broadcast %cst_2 : f32 to vector<8x256xf32>
    %19 = arith.select %17, %12, %18 : vector<8x256xi1>, vector<8x256xf32>
    %c0_3 = arith.constant 0 : index
    %20 = memref.load %arg0[%c0_3] : memref<28xf32, #tpu.memory_space<smem>>
    %21 = vector.broadcast %20 : f32 to vector<8x256xf32>
    %22 = arith.mulf %21, %19 : vector<8x256xf32>
    %23 = arith.addf %10, %22 : vector<8x256xf32>
    %24 = vector.broadcast %9 : vector<8x1xi1> to vector<8x256xi1>
    %25 = arith.andi %17, %24 : vector<8x256xi1>
    %cst_4 = arith.constant 0xFF800000 : f32
    %26 = vector.broadcast %cst_4 : f32 to vector<8x256xf32>
    %27 = arith.select %25, %12, %26 : vector<8x256xi1>, vector<8x256xf32>
    %28 = arith.maximumf %11, %27 : vector<8x256xf32>
    %c33_i32 = arith.constant 33 : i32
    %29 = tpu.dynamic_rotate %0 by %c33_i32 dim 1 : vector<8x256xf32>, i32 -> vector<8x256xf32>
    %c32_i32_5 = arith.constant 32 : i32
    %30 = vector.broadcast %c32_i32_5 : i32 to vector<8x256xi32>
    %31 = arith.cmpi sge, %1, %30 : vector<8x256xi32>
    %c1_i32 = arith.constant 1 : i32
    %32 = vector.broadcast %c1_i32 : i32 to vector<8x256xi32>
    %33 = arith.cmpi sge, %3, %32 : vector<8x256xi32>
    %34 = arith.andi %31, %33 : vector<8x256xi1>
    %cst_6 = arith.constant 0.000000e+00 : f32
    %35 = vector.broadcast %cst_6 : f32 to vector<8x256xf32>
    %36 = arith.select %34, %29, %35 : vector<8x256xi1>, vector<8x256xf32>
    %c1 = arith.constant 1 : index
    %37 = memref.load %arg0[%c1] : memref<28xf32, #tpu.memory_space<smem>>
    %38 = vector.broadcast %37 : f32 to vector<8x256xf32>
    %39 = arith.mulf %38, %36 : vector<8x256xf32>
    %40 = arith.addf %23, %39 : vector<8x256xf32>
    %41 = vector.broadcast %9 : vector<8x1xi1> to vector<8x256xi1>
    %42 = arith.andi %34, %41 : vector<8x256xi1>
    %cst_7 = arith.constant 0xFF800000 : f32
    %43 = vector.broadcast %cst_7 : f32 to vector<8x256xf32>
    %44 = arith.select %42, %29, %43 : vector<8x256xi1>, vector<8x256xf32>
    %45 = arith.maximumf %28, %44 : vector<8x256xf32>
    %c32_i32_8 = arith.constant 32 : i32
    %46 = tpu.dynamic_rotate %0 by %c32_i32_8 dim 1 : vector<8x256xf32>, i32 -> vector<8x256xf32>
    %c32_i32_9 = arith.constant 32 : i32
    %47 = vector.broadcast %c32_i32_9 : i32 to vector<8x256xi32>
    %48 = arith.cmpi sge, %1, %47 : vector<8x256xi32>
    %cst_10 = arith.constant 0.000000e+00 : f32
    %49 = vector.broadcast %cst_10 : f32 to vector<8x256xf32>
    %50 = arith.select %48, %46, %49 : vector<8x256xi1>, vector<8x256xf32>
    %c2 = arith.constant 2 : index
    %51 = memref.load %arg0[%c2] : memref<28xf32, #tpu.memory_space<smem>>
    %52 = vector.broadcast %51 : f32 to vector<8x256xf32>
    %53 = arith.mulf %52, %50 : vector<8x256xf32>
    %54 = arith.addf %40, %53 : vector<8x256xf32>
    %55 = vector.broadcast %9 : vector<8x1xi1> to vector<8x256xi1>
    %56 = arith.andi %48, %55 : vector<8x256xi1>
    %cst_11 = arith.constant 0xFF800000 : f32
    %57 = vector.broadcast %cst_11 : f32 to vector<8x256xf32>
    %58 = arith.select %56, %46, %57 : vector<8x256xi1>, vector<8x256xf32>
    %59 = arith.maximumf %45, %58 : vector<8x256xf32>
    %c31_i32 = arith.constant 31 : i32
    %60 = tpu.dynamic_rotate %0 by %c31_i32 dim 1 : vector<8x256xf32>, i32 -> vector<8x256xf32>
    %c32_i32_12 = arith.constant 32 : i32
    %61 = vector.broadcast %c32_i32_12 : i32 to vector<8x256xi32>
    %62 = arith.cmpi sge, %1, %61 : vector<8x256xi32>
    %c15_i32_13 = arith.constant 15 : i32
    %63 = vector.broadcast %c15_i32_13 : i32 to vector<8x256xi32>
    %64 = arith.cmpi slt, %3, %63 : vector<8x256xi32>
    %65 = arith.andi %62, %64 : vector<8x256xi1>
    %cst_14 = arith.constant 0.000000e+00 : f32
    %66 = vector.broadcast %cst_14 : f32 to vector<8x256xf32>
    %67 = arith.select %65, %60, %66 : vector<8x256xi1>, vector<8x256xf32>
    %c3 = arith.constant 3 : index
    %68 = memref.load %arg0[%c3] : memref<28xf32, #tpu.memory_space<smem>>
    %69 = vector.broadcast %68 : f32 to vector<8x256xf32>
    %70 = arith.mulf %69, %67 : vector<8x256xf32>
    %71 = arith.addf %54, %70 : vector<8x256xf32>
    %72 = vector.broadcast %9 : vector<8x1xi1> to vector<8x256xi1>
    %73 = arith.andi %65, %72 : vector<8x256xi1>
    %cst_15 = arith.constant 0xFF800000 : f32
    %74 = vector.broadcast %cst_15 : f32 to vector<8x256xf32>
    %75 = arith.select %73, %60, %74 : vector<8x256xi1>, vector<8x256xf32>
    %76 = arith.maximumf %59, %75 : vector<8x256xf32>
    %c30_i32 = arith.constant 30 : i32
    %77 = tpu.dynamic_rotate %0 by %c30_i32 dim 1 : vector<8x256xf32>, i32 -> vector<8x256xf32>
    %c32_i32_16 = arith.constant 32 : i32
    %78 = vector.broadcast %c32_i32_16 : i32 to vector<8x256xi32>
    %79 = arith.cmpi sge, %1, %78 : vector<8x256xi32>
    %c14_i32 = arith.constant 14 : i32
    %80 = vector.broadcast %c14_i32 : i32 to vector<8x256xi32>
    %81 = arith.cmpi slt, %3, %80 : vector<8x256xi32>
    %82 = arith.andi %79, %81 : vector<8x256xi1>
    %cst_17 = arith.constant 0.000000e+00 : f32
    %83 = vector.broadcast %cst_17 : f32 to vector<8x256xf32>
    %84 = arith.select %82, %77, %83 : vector<8x256xi1>, vector<8x256xf32>
    %c4 = arith.constant 4 : index
    %85 = memref.load %arg0[%c4] : memref<28xf32, #tpu.memory_space<smem>>
    %86 = vector.broadcast %85 : f32 to vector<8x256xf32>
    %87 = arith.mulf %86, %84 : vector<8x256xf32>
    %88 = arith.addf %71, %87 : vector<8x256xf32>
    %89 = vector.broadcast %9 : vector<8x1xi1> to vector<8x256xi1>
    %90 = arith.andi %82, %89 : vector<8x256xi1>
    %cst_18 = arith.constant 0xFF800000 : f32
    %91 = vector.broadcast %cst_18 : f32 to vector<8x256xf32>
    %92 = arith.select %90, %77, %91 : vector<8x256xi1>, vector<8x256xf32>
    %93 = arith.maximumf %76, %92 : vector<8x256xf32>
    %c18_i32 = arith.constant 18 : i32
    %94 = tpu.dynamic_rotate %0 by %c18_i32 dim 1 : vector<8x256xf32>, i32 -> vector<8x256xf32>
    %c16_i32 = arith.constant 16 : i32
    %95 = vector.broadcast %c16_i32 : i32 to vector<8x256xi32>
    %96 = arith.cmpi sge, %1, %95 : vector<8x256xi32>
    %c2_i32_19 = arith.constant 2 : i32
    %97 = vector.broadcast %c2_i32_19 : i32 to vector<8x256xi32>
    %98 = arith.cmpi sge, %3, %97 : vector<8x256xi32>
    %99 = arith.andi %96, %98 : vector<8x256xi1>
    %cst_20 = arith.constant 0.000000e+00 : f32
    %100 = vector.broadcast %cst_20 : f32 to vector<8x256xf32>
    %101 = arith.select %99, %94, %100 : vector<8x256xi1>, vector<8x256xf32>
    %c5 = arith.constant 5 : index
    %102 = memref.load %arg0[%c5] : memref<28xf32, #tpu.memory_space<smem>>
    %103 = vector.broadcast %102 : f32 to vector<8x256xf32>
    %104 = arith.mulf %103, %101 : vector<8x256xf32>
    %105 = arith.addf %88, %104 : vector<8x256xf32>
    %106 = vector.broadcast %9 : vector<8x1xi1> to vector<8x256xi1>
    %107 = arith.andi %99, %106 : vector<8x256xi1>
    %cst_21 = arith.constant 0xFF800000 : f32
    %108 = vector.broadcast %cst_21 : f32 to vector<8x256xf32>
    %109 = arith.select %107, %94, %108 : vector<8x256xi1>, vector<8x256xf32>
    %110 = arith.maximumf %93, %109 : vector<8x256xf32>
    %c17_i32 = arith.constant 17 : i32
    %111 = tpu.dynamic_rotate %0 by %c17_i32 dim 1 : vector<8x256xf32>, i32 -> vector<8x256xf32>
    %c16_i32_22 = arith.constant 16 : i32
    %112 = vector.broadcast %c16_i32_22 : i32 to vector<8x256xi32>
    %113 = arith.cmpi sge, %1, %112 : vector<8x256xi32>
    %c1_i32_23 = arith.constant 1 : i32
    %114 = vector.broadcast %c1_i32_23 : i32 to vector<8x256xi32>
    %115 = arith.cmpi sge, %3, %114 : vector<8x256xi32>
    %116 = arith.andi %113, %115 : vector<8x256xi1>
    %cst_24 = arith.constant 0.000000e+00 : f32
    %117 = vector.broadcast %cst_24 : f32 to vector<8x256xf32>
    %118 = arith.select %116, %111, %117 : vector<8x256xi1>, vector<8x256xf32>
    %c6 = arith.constant 6 : index
    %119 = memref.load %arg0[%c6] : memref<28xf32, #tpu.memory_space<smem>>
    %120 = vector.broadcast %119 : f32 to vector<8x256xf32>
    %121 = arith.mulf %120, %118 : vector<8x256xf32>
    %122 = arith.addf %105, %121 : vector<8x256xf32>
    %cst_25 = arith.constant 0xFF800000 : f32
    %123 = vector.broadcast %cst_25 : f32 to vector<8x256xf32>
    %124 = arith.select %116, %111, %123 : vector<8x256xi1>, vector<8x256xf32>
    %125 = arith.maximumf %110, %124 : vector<8x256xf32>
    %c16_i32_26 = arith.constant 16 : i32
    %126 = tpu.dynamic_rotate %0 by %c16_i32_26 dim 1 : vector<8x256xf32>, i32 -> vector<8x256xf32>
    %c16_i32_27 = arith.constant 16 : i32
    %127 = vector.broadcast %c16_i32_27 : i32 to vector<8x256xi32>
    %128 = arith.cmpi sge, %1, %127 : vector<8x256xi32>
    %cst_28 = arith.constant 0.000000e+00 : f32
    %129 = vector.broadcast %cst_28 : f32 to vector<8x256xf32>
    %130 = arith.select %128, %126, %129 : vector<8x256xi1>, vector<8x256xf32>
    %c7 = arith.constant 7 : index
    %131 = memref.load %arg0[%c7] : memref<28xf32, #tpu.memory_space<smem>>
    %132 = vector.broadcast %131 : f32 to vector<8x256xf32>
    %133 = arith.mulf %132, %130 : vector<8x256xf32>
    %134 = arith.addf %122, %133 : vector<8x256xf32>
    %cst_29 = arith.constant 0xFF800000 : f32
    %135 = vector.broadcast %cst_29 : f32 to vector<8x256xf32>
    %136 = arith.select %128, %126, %135 : vector<8x256xi1>, vector<8x256xf32>
    %137 = arith.maximumf %125, %136 : vector<8x256xf32>
    %c15_i32_30 = arith.constant 15 : i32
    %138 = tpu.dynamic_rotate %0 by %c15_i32_30 dim 1 : vector<8x256xf32>, i32 -> vector<8x256xf32>
    %c16_i32_31 = arith.constant 16 : i32
    %139 = vector.broadcast %c16_i32_31 : i32 to vector<8x256xi32>
    %140 = arith.cmpi sge, %1, %139 : vector<8x256xi32>
    %c15_i32_32 = arith.constant 15 : i32
    %141 = vector.broadcast %c15_i32_32 : i32 to vector<8x256xi32>
    %142 = arith.cmpi slt, %3, %141 : vector<8x256xi32>
    %143 = arith.andi %140, %142 : vector<8x256xi1>
    %cst_33 = arith.constant 0.000000e+00 : f32
    %144 = vector.broadcast %cst_33 : f32 to vector<8x256xf32>
    %145 = arith.select %143, %138, %144 : vector<8x256xi1>, vector<8x256xf32>
    %c8 = arith.constant 8 : index
    %146 = memref.load %arg0[%c8] : memref<28xf32, #tpu.memory_space<smem>>
    %147 = vector.broadcast %146 : f32 to vector<8x256xf32>
    %148 = arith.mulf %147, %145 : vector<8x256xf32>
    %149 = arith.addf %134, %148 : vector<8x256xf32>
    %cst_34 = arith.constant 0xFF800000 : f32
    %150 = vector.broadcast %cst_34 : f32 to vector<8x256xf32>
    %151 = arith.select %143, %138, %150 : vector<8x256xi1>, vector<8x256xf32>
    %152 = arith.maximumf %137, %151 : vector<8x256xf32>
    %c14_i32_35 = arith.constant 14 : i32
    %153 = tpu.dynamic_rotate %0 by %c14_i32_35 dim 1 : vector<8x256xf32>, i32 -> vector<8x256xf32>
    %c16_i32_36 = arith.constant 16 : i32
    %154 = vector.broadcast %c16_i32_36 : i32 to vector<8x256xi32>
    %155 = arith.cmpi sge, %1, %154 : vector<8x256xi32>
    %c14_i32_37 = arith.constant 14 : i32
    %156 = vector.broadcast %c14_i32_37 : i32 to vector<8x256xi32>
    %157 = arith.cmpi slt, %3, %156 : vector<8x256xi32>
    %158 = arith.andi %155, %157 : vector<8x256xi1>
    %cst_38 = arith.constant 0.000000e+00 : f32
    %159 = vector.broadcast %cst_38 : f32 to vector<8x256xf32>
    %160 = arith.select %158, %153, %159 : vector<8x256xi1>, vector<8x256xf32>
    %c9 = arith.constant 9 : index
    %161 = memref.load %arg0[%c9] : memref<28xf32, #tpu.memory_space<smem>>
    %162 = vector.broadcast %161 : f32 to vector<8x256xf32>
    %163 = arith.mulf %162, %160 : vector<8x256xf32>
    %164 = arith.addf %149, %163 : vector<8x256xf32>
    %165 = vector.broadcast %9 : vector<8x1xi1> to vector<8x256xi1>
    %166 = arith.andi %158, %165 : vector<8x256xi1>
    %cst_39 = arith.constant 0xFF800000 : f32
    %167 = vector.broadcast %cst_39 : f32 to vector<8x256xf32>
    %168 = arith.select %166, %153, %167 : vector<8x256xi1>, vector<8x256xf32>
    %169 = arith.maximumf %152, %168 : vector<8x256xf32>
    %c2_i32_40 = arith.constant 2 : i32
    %170 = tpu.dynamic_rotate %0 by %c2_i32_40 dim 1 : vector<8x256xf32>, i32 -> vector<8x256xf32>
    %c2_i32_41 = arith.constant 2 : i32
    %171 = vector.broadcast %c2_i32_41 : i32 to vector<8x256xi32>
    %172 = arith.cmpi sge, %3, %171 : vector<8x256xi32>
    %cst_42 = arith.constant 0.000000e+00 : f32
    %173 = vector.broadcast %cst_42 : f32 to vector<8x256xf32>
    %174 = arith.select %172, %170, %173 : vector<8x256xi1>, vector<8x256xf32>
    %c10 = arith.constant 10 : index
    %175 = memref.load %arg0[%c10] : memref<28xf32, #tpu.memory_space<smem>>
    %176 = vector.broadcast %175 : f32 to vector<8x256xf32>
    %177 = arith.mulf %176, %174 : vector<8x256xf32>
    %178 = arith.addf %164, %177 : vector<8x256xf32>
    %179 = vector.broadcast %9 : vector<8x1xi1> to vector<8x256xi1>
    %180 = arith.andi %172, %179 : vector<8x256xi1>
    %cst_43 = arith.constant 0xFF800000 : f32
    %181 = vector.broadcast %cst_43 : f32 to vector<8x256xf32>
    %182 = arith.select %180, %170, %181 : vector<8x256xi1>, vector<8x256xf32>
    %183 = arith.maximumf %169, %182 : vector<8x256xf32>
    %c1_i32_44 = arith.constant 1 : i32
    %184 = tpu.dynamic_rotate %0 by %c1_i32_44 dim 1 : vector<8x256xf32>, i32 -> vector<8x256xf32>
    %c1_i32_45 = arith.constant 1 : i32
    %185 = vector.broadcast %c1_i32_45 : i32 to vector<8x256xi32>
    %186 = arith.cmpi sge, %3, %185 : vector<8x256xi32>
    %cst_46 = arith.constant 0.000000e+00 : f32
    %187 = vector.broadcast %cst_46 : f32 to vector<8x256xf32>
    %188 = arith.select %186, %184, %187 : vector<8x256xi1>, vector<8x256xf32>
    %c11 = arith.constant 11 : index
    %189 = memref.load %arg0[%c11] : memref<28xf32, #tpu.memory_space<smem>>
    %190 = vector.broadcast %189 : f32 to vector<8x256xf32>
    %191 = arith.mulf %190, %188 : vector<8x256xf32>
    %192 = arith.addf %178, %191 : vector<8x256xf32>
    %cst_47 = arith.constant 0xFF800000 : f32
    %193 = vector.broadcast %cst_47 : f32 to vector<8x256xf32>
    %194 = arith.select %186, %184, %193 : vector<8x256xi1>, vector<8x256xf32>
    %195 = arith.maximumf %183, %194 : vector<8x256xf32>
    %c12 = arith.constant 12 : index
    %196 = memref.load %arg0[%c12] : memref<28xf32, #tpu.memory_space<smem>>
    %197 = vector.broadcast %196 : f32 to vector<8x256xf32>
    %198 = arith.mulf %197, %0 : vector<8x256xf32>
    %199 = arith.addf %192, %198 : vector<8x256xf32>
    %200 = arith.maximumf %195, %0 : vector<8x256xf32>
    %c255_i32 = arith.constant 255 : i32
    %201 = tpu.dynamic_rotate %0 by %c255_i32 dim 1 : vector<8x256xf32>, i32 -> vector<8x256xf32>
    %c15_i32_48 = arith.constant 15 : i32
    %202 = vector.broadcast %c15_i32_48 : i32 to vector<8x256xi32>
    %203 = arith.cmpi slt, %3, %202 : vector<8x256xi32>
    %cst_49 = arith.constant 0.000000e+00 : f32
    %204 = vector.broadcast %cst_49 : f32 to vector<8x256xf32>
    %205 = arith.select %203, %201, %204 : vector<8x256xi1>, vector<8x256xf32>
    %c13 = arith.constant 13 : index
    %206 = memref.load %arg0[%c13] : memref<28xf32, #tpu.memory_space<smem>>
    %207 = vector.broadcast %206 : f32 to vector<8x256xf32>
    %208 = arith.mulf %207, %205 : vector<8x256xf32>
    %209 = arith.addf %199, %208 : vector<8x256xf32>
    %cst_50 = arith.constant 0xFF800000 : f32
    %210 = vector.broadcast %cst_50 : f32 to vector<8x256xf32>
    %211 = arith.select %203, %201, %210 : vector<8x256xi1>, vector<8x256xf32>
    %212 = arith.maximumf %200, %211 : vector<8x256xf32>
    %c254_i32 = arith.constant 254 : i32
    %213 = tpu.dynamic_rotate %0 by %c254_i32 dim 1 : vector<8x256xf32>, i32 -> vector<8x256xf32>
    %c14_i32_51 = arith.constant 14 : i32
    %214 = vector.broadcast %c14_i32_51 : i32 to vector<8x256xi32>
    %215 = arith.cmpi slt, %3, %214 : vector<8x256xi32>
    %cst_52 = arith.constant 0.000000e+00 : f32
    %216 = vector.broadcast %cst_52 : f32 to vector<8x256xf32>
    %217 = arith.select %215, %213, %216 : vector<8x256xi1>, vector<8x256xf32>
    %c14 = arith.constant 14 : index
    %218 = memref.load %arg0[%c14] : memref<28xf32, #tpu.memory_space<smem>>
    %219 = vector.broadcast %218 : f32 to vector<8x256xf32>
    %220 = arith.mulf %219, %217 : vector<8x256xf32>
    %221 = arith.addf %209, %220 : vector<8x256xf32>
    %222 = vector.broadcast %9 : vector<8x1xi1> to vector<8x256xi1>
    %223 = arith.andi %215, %222 : vector<8x256xi1>
    %cst_53 = arith.constant 0xFF800000 : f32
    %224 = vector.broadcast %cst_53 : f32 to vector<8x256xf32>
    %225 = arith.select %223, %213, %224 : vector<8x256xi1>, vector<8x256xf32>
    %226 = arith.maximumf %212, %225 : vector<8x256xf32>
    %c242_i32 = arith.constant 242 : i32
    %227 = tpu.dynamic_rotate %0 by %c242_i32 dim 1 : vector<8x256xf32>, i32 -> vector<8x256xf32>
    %c240_i32 = arith.constant 240 : i32
    %228 = vector.broadcast %c240_i32 : i32 to vector<8x256xi32>
    %229 = arith.cmpi slt, %1, %228 : vector<8x256xi32>
    %c2_i32_54 = arith.constant 2 : i32
    %230 = vector.broadcast %c2_i32_54 : i32 to vector<8x256xi32>
    %231 = arith.cmpi sge, %3, %230 : vector<8x256xi32>
    %232 = arith.andi %229, %231 : vector<8x256xi1>
    %cst_55 = arith.constant 0.000000e+00 : f32
    %233 = vector.broadcast %cst_55 : f32 to vector<8x256xf32>
    %234 = arith.select %232, %227, %233 : vector<8x256xi1>, vector<8x256xf32>
    %c15 = arith.constant 15 : index
    %235 = memref.load %arg0[%c15] : memref<28xf32, #tpu.memory_space<smem>>
    %236 = vector.broadcast %235 : f32 to vector<8x256xf32>
    %237 = arith.mulf %236, %234 : vector<8x256xf32>
    %238 = arith.addf %221, %237 : vector<8x256xf32>
    %239 = vector.broadcast %9 : vector<8x1xi1> to vector<8x256xi1>
    %240 = arith.andi %232, %239 : vector<8x256xi1>
    %cst_56 = arith.constant 0xFF800000 : f32
    %241 = vector.broadcast %cst_56 : f32 to vector<8x256xf32>
    %242 = arith.select %240, %227, %241 : vector<8x256xi1>, vector<8x256xf32>
    %243 = arith.maximumf %226, %242 : vector<8x256xf32>
    %c241_i32 = arith.constant 241 : i32
    %244 = tpu.dynamic_rotate %0 by %c241_i32 dim 1 : vector<8x256xf32>, i32 -> vector<8x256xf32>
    %c240_i32_57 = arith.constant 240 : i32
    %245 = vector.broadcast %c240_i32_57 : i32 to vector<8x256xi32>
    %246 = arith.cmpi slt, %1, %245 : vector<8x256xi32>
    %c1_i32_58 = arith.constant 1 : i32
    %247 = vector.broadcast %c1_i32_58 : i32 to vector<8x256xi32>
    %248 = arith.cmpi sge, %3, %247 : vector<8x256xi32>
    %249 = arith.andi %246, %248 : vector<8x256xi1>
    %cst_59 = arith.constant 0.000000e+00 : f32
    %250 = vector.broadcast %cst_59 : f32 to vector<8x256xf32>
    %251 = arith.select %249, %244, %250 : vector<8x256xi1>, vector<8x256xf32>
    %c16 = arith.constant 16 : index
    %252 = memref.load %arg0[%c16] : memref<28xf32, #tpu.memory_space<smem>>
    %253 = vector.broadcast %252 : f32 to vector<8x256xf32>
    %254 = arith.mulf %253, %251 : vector<8x256xf32>
    %255 = arith.addf %238, %254 : vector<8x256xf32>
    %cst_60 = arith.constant 0xFF800000 : f32
    %256 = vector.broadcast %cst_60 : f32 to vector<8x256xf32>
    %257 = arith.select %249, %244, %256 : vector<8x256xi1>, vector<8x256xf32>
    %258 = arith.maximumf %243, %257 : vector<8x256xf32>
    %c240_i32_61 = arith.constant 240 : i32
    %259 = tpu.dynamic_rotate %0 by %c240_i32_61 dim 1 : vector<8x256xf32>, i32 -> vector<8x256xf32>
    %c240_i32_62 = arith.constant 240 : i32
    %260 = vector.broadcast %c240_i32_62 : i32 to vector<8x256xi32>
    %261 = arith.cmpi slt, %1, %260 : vector<8x256xi32>
    %cst_63 = arith.constant 0.000000e+00 : f32
    %262 = vector.broadcast %cst_63 : f32 to vector<8x256xf32>
    %263 = arith.select %261, %259, %262 : vector<8x256xi1>, vector<8x256xf32>
    %c17 = arith.constant 17 : index
    %264 = memref.load %arg0[%c17] : memref<28xf32, #tpu.memory_space<smem>>
    %265 = vector.broadcast %264 : f32 to vector<8x256xf32>
    %266 = arith.mulf %265, %263 : vector<8x256xf32>
    %267 = arith.addf %255, %266 : vector<8x256xf32>
    %cst_64 = arith.constant 0xFF800000 : f32
    %268 = vector.broadcast %cst_64 : f32 to vector<8x256xf32>
    %269 = arith.select %261, %259, %268 : vector<8x256xi1>, vector<8x256xf32>
    %270 = arith.maximumf %258, %269 : vector<8x256xf32>
    %c239_i32 = arith.constant 239 : i32
    %271 = tpu.dynamic_rotate %0 by %c239_i32 dim 1 : vector<8x256xf32>, i32 -> vector<8x256xf32>
    %c240_i32_65 = arith.constant 240 : i32
    %272 = vector.broadcast %c240_i32_65 : i32 to vector<8x256xi32>
    %273 = arith.cmpi slt, %1, %272 : vector<8x256xi32>
    %c15_i32_66 = arith.constant 15 : i32
    %274 = vector.broadcast %c15_i32_66 : i32 to vector<8x256xi32>
    %275 = arith.cmpi slt, %3, %274 : vector<8x256xi32>
    %276 = arith.andi %273, %275 : vector<8x256xi1>
    %cst_67 = arith.constant 0.000000e+00 : f32
    %277 = vector.broadcast %cst_67 : f32 to vector<8x256xf32>
    %278 = arith.select %276, %271, %277 : vector<8x256xi1>, vector<8x256xf32>
    %c18 = arith.constant 18 : index
    %279 = memref.load %arg0[%c18] : memref<28xf32, #tpu.memory_space<smem>>
    %280 = vector.broadcast %279 : f32 to vector<8x256xf32>
    %281 = arith.mulf %280, %278 : vector<8x256xf32>
    %282 = arith.addf %267, %281 : vector<8x256xf32>
    %cst_68 = arith.constant 0xFF800000 : f32
    %283 = vector.broadcast %cst_68 : f32 to vector<8x256xf32>
    %284 = arith.select %276, %271, %283 : vector<8x256xi1>, vector<8x256xf32>
    %285 = arith.maximumf %270, %284 : vector<8x256xf32>
    %c238_i32 = arith.constant 238 : i32
    %286 = tpu.dynamic_rotate %0 by %c238_i32 dim 1 : vector<8x256xf32>, i32 -> vector<8x256xf32>
    %c240_i32_69 = arith.constant 240 : i32
    %287 = vector.broadcast %c240_i32_69 : i32 to vector<8x256xi32>
    %288 = arith.cmpi slt, %1, %287 : vector<8x256xi32>
    %c14_i32_70 = arith.constant 14 : i32
    %289 = vector.broadcast %c14_i32_70 : i32 to vector<8x256xi32>
    %290 = arith.cmpi slt, %3, %289 : vector<8x256xi32>
    %291 = arith.andi %288, %290 : vector<8x256xi1>
    %cst_71 = arith.constant 0.000000e+00 : f32
    %292 = vector.broadcast %cst_71 : f32 to vector<8x256xf32>
    %293 = arith.select %291, %286, %292 : vector<8x256xi1>, vector<8x256xf32>
    %c19 = arith.constant 19 : index
    %294 = memref.load %arg0[%c19] : memref<28xf32, #tpu.memory_space<smem>>
    %295 = vector.broadcast %294 : f32 to vector<8x256xf32>
    %296 = arith.mulf %295, %293 : vector<8x256xf32>
    %297 = arith.addf %282, %296 : vector<8x256xf32>
    %298 = vector.broadcast %9 : vector<8x1xi1> to vector<8x256xi1>
    %299 = arith.andi %291, %298 : vector<8x256xi1>
    %cst_72 = arith.constant 0xFF800000 : f32
    %300 = vector.broadcast %cst_72 : f32 to vector<8x256xf32>
    %301 = arith.select %299, %286, %300 : vector<8x256xi1>, vector<8x256xf32>
    %302 = arith.maximumf %285, %301 : vector<8x256xf32>
    %c226_i32 = arith.constant 226 : i32
    %303 = tpu.dynamic_rotate %0 by %c226_i32 dim 1 : vector<8x256xf32>, i32 -> vector<8x256xf32>
    %c224_i32 = arith.constant 224 : i32
    %304 = vector.broadcast %c224_i32 : i32 to vector<8x256xi32>
    %305 = arith.cmpi slt, %1, %304 : vector<8x256xi32>
    %c2_i32_73 = arith.constant 2 : i32
    %306 = vector.broadcast %c2_i32_73 : i32 to vector<8x256xi32>
    %307 = arith.cmpi sge, %3, %306 : vector<8x256xi32>
    %308 = arith.andi %305, %307 : vector<8x256xi1>
    %cst_74 = arith.constant 0.000000e+00 : f32
    %309 = vector.broadcast %cst_74 : f32 to vector<8x256xf32>
    %310 = arith.select %308, %303, %309 : vector<8x256xi1>, vector<8x256xf32>
    %c20 = arith.constant 20 : index
    %311 = memref.load %arg0[%c20] : memref<28xf32, #tpu.memory_space<smem>>
    %312 = vector.broadcast %311 : f32 to vector<8x256xf32>
    %313 = arith.mulf %312, %310 : vector<8x256xf32>
    %314 = arith.addf %297, %313 : vector<8x256xf32>
    %315 = vector.broadcast %9 : vector<8x1xi1> to vector<8x256xi1>
    %316 = arith.andi %308, %315 : vector<8x256xi1>
    %cst_75 = arith.constant 0xFF800000 : f32
    %317 = vector.broadcast %cst_75 : f32 to vector<8x256xf32>
    %318 = arith.select %316, %303, %317 : vector<8x256xi1>, vector<8x256xf32>
    %319 = arith.maximumf %302, %318 : vector<8x256xf32>
    %c225_i32 = arith.constant 225 : i32
    %320 = tpu.dynamic_rotate %0 by %c225_i32 dim 1 : vector<8x256xf32>, i32 -> vector<8x256xf32>
    %c224_i32_76 = arith.constant 224 : i32
    %321 = vector.broadcast %c224_i32_76 : i32 to vector<8x256xi32>
    %322 = arith.cmpi slt, %1, %321 : vector<8x256xi32>
    %c1_i32_77 = arith.constant 1 : i32
    %323 = vector.broadcast %c1_i32_77 : i32 to vector<8x256xi32>
    %324 = arith.cmpi sge, %3, %323 : vector<8x256xi32>
    %325 = arith.andi %322, %324 : vector<8x256xi1>
    %cst_78 = arith.constant 0.000000e+00 : f32
    %326 = vector.broadcast %cst_78 : f32 to vector<8x256xf32>
    %327 = arith.select %325, %320, %326 : vector<8x256xi1>, vector<8x256xf32>
    %c21 = arith.constant 21 : index
    %328 = memref.load %arg0[%c21] : memref<28xf32, #tpu.memory_space<smem>>
    %329 = vector.broadcast %328 : f32 to vector<8x256xf32>
    %330 = arith.mulf %329, %327 : vector<8x256xf32>
    %331 = arith.addf %314, %330 : vector<8x256xf32>
    %332 = vector.broadcast %9 : vector<8x1xi1> to vector<8x256xi1>
    %333 = arith.andi %325, %332 : vector<8x256xi1>
    %cst_79 = arith.constant 0xFF800000 : f32
    %334 = vector.broadcast %cst_79 : f32 to vector<8x256xf32>
    %335 = arith.select %333, %320, %334 : vector<8x256xi1>, vector<8x256xf32>
    %336 = arith.maximumf %319, %335 : vector<8x256xf32>
    %c224_i32_80 = arith.constant 224 : i32
    %337 = tpu.dynamic_rotate %0 by %c224_i32_80 dim 1 : vector<8x256xf32>, i32 -> vector<8x256xf32>
    %c224_i32_81 = arith.constant 224 : i32
    %338 = vector.broadcast %c224_i32_81 : i32 to vector<8x256xi32>
    %339 = arith.cmpi slt, %1, %338 : vector<8x256xi32>
    %cst_82 = arith.constant 0.000000e+00 : f32
    %340 = vector.broadcast %cst_82 : f32 to vector<8x256xf32>
    %341 = arith.select %339, %337, %340 : vector<8x256xi1>, vector<8x256xf32>
    %c22 = arith.constant 22 : index
    %342 = memref.load %arg0[%c22] : memref<28xf32, #tpu.memory_space<smem>>
    %343 = vector.broadcast %342 : f32 to vector<8x256xf32>
    %344 = arith.mulf %343, %341 : vector<8x256xf32>
    %345 = arith.addf %331, %344 : vector<8x256xf32>
    %346 = vector.broadcast %9 : vector<8x1xi1> to vector<8x256xi1>
    %347 = arith.andi %339, %346 : vector<8x256xi1>
    %cst_83 = arith.constant 0xFF800000 : f32
    %348 = vector.broadcast %cst_83 : f32 to vector<8x256xf32>
    %349 = arith.select %347, %337, %348 : vector<8x256xi1>, vector<8x256xf32>
    %350 = arith.maximumf %336, %349 : vector<8x256xf32>
    %c223_i32 = arith.constant 223 : i32
    %351 = tpu.dynamic_rotate %0 by %c223_i32 dim 1 : vector<8x256xf32>, i32 -> vector<8x256xf32>
    %c224_i32_84 = arith.constant 224 : i32
    %352 = vector.broadcast %c224_i32_84 : i32 to vector<8x256xi32>
    %353 = arith.cmpi slt, %1, %352 : vector<8x256xi32>
    %c15_i32_85 = arith.constant 15 : i32
    %354 = vector.broadcast %c15_i32_85 : i32 to vector<8x256xi32>
    %355 = arith.cmpi slt, %3, %354 : vector<8x256xi32>
    %356 = arith.andi %353, %355 : vector<8x256xi1>
    %cst_86 = arith.constant 0.000000e+00 : f32
    %357 = vector.broadcast %cst_86 : f32 to vector<8x256xf32>
    %358 = arith.select %356, %351, %357 : vector<8x256xi1>, vector<8x256xf32>
    %c23 = arith.constant 23 : index
    %359 = memref.load %arg0[%c23] : memref<28xf32, #tpu.memory_space<smem>>
    %360 = vector.broadcast %359 : f32 to vector<8x256xf32>
    %361 = arith.mulf %360, %358 : vector<8x256xf32>
    %362 = arith.addf %345, %361 : vector<8x256xf32>
    %363 = vector.broadcast %9 : vector<8x1xi1> to vector<8x256xi1>
    %364 = arith.andi %356, %363 : vector<8x256xi1>
    %cst_87 = arith.constant 0xFF800000 : f32
    %365 = vector.broadcast %cst_87 : f32 to vector<8x256xf32>
    %366 = arith.select %364, %351, %365 : vector<8x256xi1>, vector<8x256xf32>
    %367 = arith.maximumf %350, %366 : vector<8x256xf32>
    %c222_i32 = arith.constant 222 : i32
    %368 = tpu.dynamic_rotate %0 by %c222_i32 dim 1 : vector<8x256xf32>, i32 -> vector<8x256xf32>
    %c224_i32_88 = arith.constant 224 : i32
    %369 = vector.broadcast %c224_i32_88 : i32 to vector<8x256xi32>
    %370 = arith.cmpi slt, %1, %369 : vector<8x256xi32>
    %c14_i32_89 = arith.constant 14 : i32
    %371 = vector.broadcast %c14_i32_89 : i32 to vector<8x256xi32>
    %372 = arith.cmpi slt, %3, %371 : vector<8x256xi32>
    %373 = arith.andi %370, %372 : vector<8x256xi1>
    %cst_90 = arith.constant 0.000000e+00 : f32
    %374 = vector.broadcast %cst_90 : f32 to vector<8x256xf32>
    %375 = arith.select %373, %368, %374 : vector<8x256xi1>, vector<8x256xf32>
    %c24 = arith.constant 24 : index
    %376 = memref.load %arg0[%c24] : memref<28xf32, #tpu.memory_space<smem>>
    %377 = vector.broadcast %376 : f32 to vector<8x256xf32>
    %378 = arith.mulf %377, %375 : vector<8x256xf32>
    %379 = arith.addf %362, %378 : vector<8x256xf32>
    %380 = vector.broadcast %9 : vector<8x1xi1> to vector<8x256xi1>
    %381 = arith.andi %373, %380 : vector<8x256xi1>
    %cst_91 = arith.constant 0xFF800000 : f32
    %382 = vector.broadcast %cst_91 : f32 to vector<8x256xf32>
    %383 = arith.select %381, %368, %382 : vector<8x256xi1>, vector<8x256xf32>
    %384 = arith.maximumf %367, %383 : vector<8x256xf32>
    %c25 = arith.constant 25 : index
    %385 = memref.load %arg0[%c25] : memref<28xf32, #tpu.memory_space<smem>>
    %c26 = arith.constant 26 : index
    %386 = memref.load %arg0[%c26] : memref<28xf32, #tpu.memory_space<smem>>
    %c27 = arith.constant 27 : index
    %387 = memref.load %arg0[%c27] : memref<28xf32, #tpu.memory_space<smem>>
    %388 = vector.extract_strided_slice %379 {offsets = [0, 0], sizes = [2, 256], strides = [1, 1]} : vector<8x256xf32> to vector<2x256xf32>
    %389 = vector.extract_strided_slice %384 {offsets = [2, 0], sizes = [2, 256], strides = [1, 1]} : vector<8x256xf32> to vector<2x256xf32>
    %390 = vector.extract_strided_slice %384 {offsets = [4, 0], sizes = [2, 256], strides = [1, 1]} : vector<8x256xf32> to vector<2x256xf32>
    %391 = vector.broadcast %385 : f32 to vector<2x256xf32>
    %392 = arith.addf %388, %391 : vector<2x256xf32>
    %393 = vector.broadcast %386 : f32 to vector<2x256xf32>
    %394 = arith.mulf %393, %389 : vector<2x256xf32>
    %395 = arith.addf %392, %394 : vector<2x256xf32>
    %396 = vector.broadcast %387 : f32 to vector<2x256xf32>
    %397 = arith.mulf %396, %390 : vector<2x256xf32>
    %398 = arith.addf %395, %397 : vector<2x256xf32>
    %c0_92 = arith.constant 0 : index
    %c0_93 = arith.constant 0 : index
    %399 = vector.load %arg2[%c0_92, %c0_93] : memref<2x256xf32, #tpu.memory_space<vmem>>, vector<2x256xf32>
    tpu.vector_store %arg2[%c0_92, %c0_93], %398 {strides = array<i32>} : memref<2x256xf32, #tpu.memory_space<vmem>>, vector<2x256xf32>,
    return
  }
}

</mosaic_0001>

<llo_original>
// kernel: tpu_custom_call.1
$region0: #{tpu_custom_call.1}
  #allocation0 [shape = 'u32[]', space=smem, size = 0x4, offset = 0x4, fixed_abs, tag = 'smem constant byte address 0x4 - core index']
  #allocation1 [shape = 'u32[144,128]{1,0:T(1,128)}', space=vmem, size = 0x12000, scoped, tag = 'internal scratch']
  %s0 = inlined_call_operand.hbm [shape: f32[28], index: 0, kind: input, shape index: {}]
  %s1 = inlined_call_operand.hbm [shape: f32[8,256], index: 1, kind: input, shape index: {}]
  %s2 = inlined_call_operand.hbm [shape: f32[2,256], index: 2, kind: output, shape index: {}]
  %s3 = sld [smem:[#allocation0]]
  $region26: #{tpu_custom_call.1} parent=0
    _
  %s5 = ssub.s32 1, %s3
  %s6 = scalar_select 0, %s5, %s3
  $region1: #{tpu_custom_call.1} parent=0
    #allocation2 [shape = 'u8[512]{0}', space=smem, size = 0x200, scoped, tag = 'input window, operand 0, single buffered']
    #allocation3 [shape = 's32[1]{0}', space=sflag, size = 0x4, scoped, tag = 'scoped memory for tpu_custom_call.1']
    #allocation4 [shape = 's32[1]{0}', space=sflag, size = 0x4, scoped, tag = 'scoped memory for tpu_custom_call.1']
    #allocation5 [shape = 's32[1]{0}', space=sflag, size = 0x4, scoped, tag = 'scoped memory for tpu_custom_call.1']
    #allocation6 [shape = 'u8[8192]{0}', space=vmem, size = 0x2000, scoped, tag = 'input window, operand 1, single buffered']
    #allocation7 [shape = 'u8[2048]{0}', space=vmem, size = 0x800, scoped, tag = 'output window, operand 0, single buffered']
    %7 = vsyncpa [#allocation5], 0
    %8 = vsyncpa [#allocation3], 0
    %9 = vsyncpa [#allocation4], 0
    // Predicated region
    $region2: #{tpu_custom_call.1} parent=1 // pred_check
      _
    $region3: #{tpu_custom_call.1} parent=1 // pred_check_branch
      %11 = sbr.rel (0) target = $region5
    $region4: #{tpu_custom_call.1} parent=1 // pred_region
      %s13 = ssub.s32 16, 16
      %14 = vsyncadd [#allocation5], %s13
      %17 = dma.hbm_to_smem %s0, 16, [#allocation2], [#allocation5]
    $region5: #{tpu_custom_call.1} parent=1 // pred_fallthru
      _
    // Predicated region
    $region6: #{tpu_custom_call.1} parent=1 // pred_check
      _
    $region7: #{tpu_custom_call.1} parent=1 // pred_check_branch
      %19 = sbr.rel (0) target = $region9
    $region8: #{tpu_custom_call.1} parent=1 // pred_region
      %s21 = ssub.s32 256, 256
      %22 = vsyncadd [#allocation3], %s21
      %s24 = sshll.u32 [#allocation6], 4
      %s25 = int_to_ptr.vmem [resolvable:$true] %s24
      %27 = dma.hbm_to_vmem [thread:$0]  %s1, 256, %s25, [#allocation3]
    $region9: #{tpu_custom_call.1} parent=1 // pred_fallthru
      _
    // Predicated region
    $region10: #{tpu_custom_call.1} parent=1 // pred_check
      _
    $region11: #{tpu_custom_call.1} parent=1 // pred_check_branch
      %29 = sbr.rel (0) target = $region13
    $region12: #{tpu_custom_call.1} parent=1 // pred_region
      %30 = dma.done [#allocation5], 16
    $region13: #{tpu_custom_call.1} parent=1 // pred_fallthru
      _
    // Predicated region
    $region14: #{tpu_custom_call.1} parent=1 // pred_check
      _
    $region15: #{tpu_custom_call.1} parent=1 // pred_check_branch
      %32 = sbr.rel (0) target = $region17
    $region16: #{tpu_custom_call.1} parent=1 // pred_region
      %33 = dma.done [#allocation3], 256
    $region17: #{tpu_custom_call.1} parent=1 // pred_fallthru
      _
    %34 = sfence
    %v35 = vld [vmem:[#allocation6] sm:$0xff]
    %v36 = vld [vmem:[#allocation6 + $0x8] sm:$0xff]
    %v37 = vlaneseq
    %v38 = vand.u32 %v37, 127
    %v39 = vadd.s32 %v38, 128
    %v40 = vand.u32 %v38, 15
    %v41 = vand.u32 %v39, 15
    %v42 = vlaneseq
    %v43 = vshrl.u32 %v42, 7
    %vm44 = vcmp.ge.s32.totalorder %v43, 4
    %vm45 = vcmp.lt.s32.totalorder %v43, 6
    %vm46 = vmand %vm44, %vm45
    %47 = vrot.lane.b32.xlu0 %v35, 34
    %v48 = vpop.permute.xlu0 %47
    %49 = vrot.lane.b32.xlu0 %v36, 34
    %v50 = vpop.permute.xlu0 %49
    %vm51 = vcmp.lt.s32.totalorder %v38, 34
    %v52 = vsel %vm51, %v48, %v50
    %v53 = vsel %vm51, %v50, %v48
    %vm54 = vcmp.ge.s32.totalorder %v38, 32
    %vm55 = vcmp.ge.s32.totalorder %v39, 32
    %vm56 = vcmp.ge.s32.totalorder %v40, 2
    %vm57 = vcmp.ge.s32.totalorder %v41, 2
    %vm58 = vmand %vm54, %vm56
    %vm59 = vmand %vm55, %vm57
    %v60 = vsel %vm58, %v53, 0.0
    %v61 = vsel %vm59, %v52, 0.0
    %s62 = sld [smem:[#allocation2]]
    %v63 = vstv %s62
    %v64 = vmul.f32 %v63, %v60
    %v65 = vmul.f32 %v63, %v61
    %v66 = vadd.f32 %v64, 0.0
    %v67 = vadd.f32 %v65, 0.0
    %v68 = vsel %vm46, 1, 0
    %vm69 = vcmp.eq.s32.totalorder %v68, 1
    %vm70 = vmand %vm58, %vm69
    %vm71 = vmand %vm59, %vm69
    %v72 = vsel %vm70, %v53, -inf
    %v73 = vsel %vm71, %v52, -inf
    %74 = vrot.lane.b32.xlu0 %v35, 33
    %v75 = vpop.permute.xlu0 %74
    %76 = vrot.lane.b32.xlu0 %v36, 33
    %v77 = vpop.permute.xlu0 %76
    %vm78 = vcmp.lt.s32.totalorder %v38, 33
    %v79 = vsel %vm78, %v75, %v77
    %v80 = vsel %vm78, %v77, %v75
    %vm81 = vcmp.ge.s32.totalorder %v40, 1
    %vm82 = vcmp.ge.s32.totalorder %v41, 1
    %vm83 = vmand %vm54, %vm81
    %vm84 = vmand %vm55, %vm82
    %v85 = vsel %vm83, %v80, 0.0
    %v86 = vsel %vm84, %v79, 0.0
    %s87 = sld [smem:[#allocation2 + $0x1]]
    %v88 = vstv %s87
    %v89 = vmul.f32 %v88, %v85
    %v90 = vmul.f32 %v88, %v86
    %v91 = vadd.f32 %v66, %v89
    %v92 = vadd.f32 %v67, %v90
    %vm93 = vmand %vm83, %vm69
    %vm94 = vmand %vm84, %vm69
    %v95 = vsel %vm93, %v80, -inf
    %v96 = vsel %vm94, %v79, -inf
    %v97 = vmax.f32 %v72, %v95
    %v98 = vmax.f32 %v73, %v96
    %99 = vrot.lane.b32.xlu0 %v35, 32
    %v100 = vpop.permute.xlu0 %99
    %101 = vrot.lane.b32.xlu0 %v36, 32
    %v102 = vpop.permute.xlu0 %101
    %vm103 = vcmp.lt.s32.totalorder %v38, 32
    %v104 = vsel %vm103, %v100, %v102
    %v105 = vsel %vm103, %v102, %v100
    %v106 = vsel %vm54, %v105, 0.0
    %v107 = vsel %vm55, %v104, 0.0
    %s108 = sld [smem:[#allocation2 + $0x2]]
    %v109 = vstv %s108
    %v110 = vmul.f32 %v109, %v106
    %v111 = vmul.f32 %v109, %v107
    %v112 = vadd.f32 %v91, %v110
    %v113 = vadd.f32 %v92, %v111
    %vm114 = vmand %vm54, %vm69
    %vm115 = vmand %vm55, %vm69
    %v116 = vsel %vm114, %v105, -inf
    %v117 = vsel %vm115, %v104, -inf
    %v118 = vmax.f32 %v97, %v116
    %v119 = vmax.f32 %v98, %v117
    %120 = vrot.lane.b32.xlu0 %v35, 31
    %v121 = vpop.permute.xlu0 %120
    %122 = vrot.lane.b32.xlu0 %v36, 31
    %v123 = vpop.permute.xlu0 %122
    %vm124 = vcmp.lt.s32.totalorder %v38, 31
    %v125 = vsel %vm124, %v121, %v123
    %v126 = vsel %vm124, %v123, %v121
    %vm127 = vcmp.lt.s32.totalorder %v40, 15
    %vm128 = vcmp.lt.s32.totalorder %v41, 15
    %vm129 = vmand %vm54, %vm127
    %vm130 = vmand %vm55, %vm128
    %v131 = vsel %vm129, %v126, 0.0
    %v132 = vsel %vm130, %v125, 0.0
    %s133 = sld [smem:[#allocation2 + $0x3]]
    %v134 = vstv %s133
    %v135 = vmul.f32 %v134, %v131
    %v136 = vmul.f32 %v134, %v132
    %v137 = vadd.f32 %v112, %v135
    %v138 = vadd.f32 %v113, %v136
    %vm139 = vmand %vm129, %vm69
    %vm140 = vmand %vm130, %vm69
    %v141 = vsel %vm139, %v126, -inf
    %v142 = vsel %vm140, %v125, -inf
    %v143 = vmax.f32 %v118, %v141
    %v144 = vmax.f32 %v119, %v142
    %145 = vrot.lane.b32.xlu0 %v35, 30
    %v146 = vpop.permute.xlu0 %145
    %147 = vrot.lane.b32.xlu0 %v36, 30
    %v148 = vpop.permute.xlu0 %147
    %vm149 = vcmp.lt.s32.totalorder %v38, 30
    %v150 = vsel %vm149, %v146, %v148
    %v151 = vsel %vm149, %v148, %v146
    %vm152 = vcmp.lt.s32.totalorder %v40, 14
    %vm153 = vcmp.lt.s32.totalorder %v41, 14
    %vm154 = vmand %vm54, %vm152
    %vm155 = vmand %vm55, %vm153
    %v156 = vsel %vm154, %v151, 0.0
    %v157 = vsel %vm155, %v150, 0.0
    %s158 = sld [smem:[#allocation2 + $0x4]]
    %v159 = vstv %s158
    %v160 = vmul.f32 %v159, %v156
    %v161 = vmul.f32 %v159, %v157
    %v162 = vadd.f32 %v137, %v160
    %v163 = vadd.f32 %v138, %v161
    %vm164 = vmand %vm154, %vm69
    %vm165 = vmand %vm155, %vm69
    %v166 = vsel %vm164, %v151, -inf
    %v167 = vsel %vm165, %v150, -inf
    %v168 = vmax.f32 %v143, %v166
    %v169 = vmax.f32 %v144, %v167
    %170 = vrot.lane.b32.xlu0 %v35, 18
    %v171 = vpop.permute.xlu0 %170
    %172 = vrot.lane.b32.xlu0 %v36, 18
    %v173 = vpop.permute.xlu0 %172
    %vm174 = vcmp.lt.s32.totalorder %v38, 18
    %v175 = vsel %vm174, %v171, %v173
    %v176 = vsel %vm174, %v173, %v171
    %vm177 = vcmp.ge.s32.totalorder %v38, 16
    %vm178 = vcmp.ge.s32.totalorder %v39, 16
    %vm179 = vmand %vm177, %vm56
    %vm180 = vmand %vm178, %vm57
    %v181 = vsel %vm179, %v176, 0.0
    %v182 = vsel %vm180, %v175, 0.0
    %s183 = sld [smem:[#allocation2 + $0x5]]
    %v184 = vstv %s183
    %v185 = vmul.f32 %v184, %v181
    %v186 = vmul.f32 %v184, %v182
    %v187 = vadd.f32 %v162, %v185
    %v188 = vadd.f32 %v163, %v186
    %vm189 = vmand %vm179, %vm69
    %vm190 = vmand %vm180, %vm69
    %v191 = vsel %vm189, %v176, -inf
    %v192 = vsel %vm190, %v175, -inf
    %v193 = vmax.f32 %v168, %v191
    %v194 = vmax.f32 %v169, %v192
    %195 = vrot.lane.b32.xlu0 %v35, 17
    %v196 = vpop.permute.xlu0 %195
    %197 = vrot.lane.b32.xlu0 %v36, 17
    %v198 = vpop.permute.xlu0 %197
    %vm199 = vcmp.lt.s32.totalorder %v38, 17
    %v200 = vsel %vm199, %v196, %v198
    %v201 = vsel %vm199, %v198, %v196
    %vm202 = vmand %vm177, %vm81
    %vm203 = vmand %vm178, %vm82
    %v204 = vsel %vm202, %v201, 0.0
    %v205 = vsel %vm203, %v200, 0.0
    %s206 = sld [smem:[#allocation2 + $0x6]]
    %v207 = vstv %s206
    %v208 = vmul.f32 %v207, %v204
    %v209 = vmul.f32 %v207, %v205
    %v210 = vadd.f32 %v187, %v208
    %v211 = vadd.f32 %v188, %v209
    %v212 = vsel %vm202, %v201, -inf
    %v213 = vsel %vm203, %v200, -inf
    %v214 = vmax.f32 %v193, %v212
    %v215 = vmax.f32 %v194, %v213
    %216 = vrot.lane.b32.xlu0 %v35, 16
    %v217 = vpop.permute.xlu0 %216
    %218 = vrot.lane.b32.xlu0 %v36, 16
    %v219 = vpop.permute.xlu0 %218
    %vm220 = vcmp.lt.s32.totalorder %v38, 16
    %v221 = vsel %vm220, %v217, %v219
    %v222 = vsel %vm220, %v219, %v217
    %v223 = vsel %vm177, %v222, 0.0
    %v224 = vsel %vm178, %v221, 0.0
    %s225 = sld [smem:[#allocation2 + $0x7]]
    %v226 = vstv %s225
    %v227 = vmul.f32 %v226, %v223
    %v228 = vmul.f32 %v226, %v224
    %v229 = vadd.f32 %v210, %v227
    %v230 = vadd.f32 %v211, %v228
    %v231 = vsel %vm177, %v222, -inf
    %v232 = vsel %vm178, %v221, -inf
    %v233 = vmax.f32 %v214, %v231
    %v234 = vmax.f32 %v215, %v232
    %235 = vrot.lane.b32.xlu0 %v35, 15
    %v236 = vpop.permute.xlu0 %235
    %237 = vrot.lane.b32.xlu0 %v36, 15
    %v238 = vpop.permute.xlu0 %237
    %vm239 = vcmp.lt.s32.totalorder %v38, 15
    %v240 = vsel %vm239, %v236, %v238
    %v241 = vsel %vm239, %v238, %v236
    %vm242 = vmand %vm177, %vm127
    %vm243 = vmand %vm178, %vm128
    %v244 = vsel %vm242, %v241, 0.0
    %v245 = vsel %vm243, %v240, 0.0
    %s246 = sld [smem:[#allocation2 + $0x8]]
    %v247 = vstv %s246
    %v248 = vmul.f32 %v247, %v244
    %v249 = vmul.f32 %v247, %v245
    %v250 = vadd.f32 %v229, %v248
    %v251 = vadd.f32 %v230, %v249
    %v252 = vsel %vm242, %v241, -inf
    %v253 = vsel %vm243, %v240, -inf
    %v254 = vmax.f32 %v233, %v252
    %v255 = vmax.f32 %v234, %v253
    %256 = vrot.lane.b32.xlu0 %v35, 14
    %v257 = vpop.permute.xlu0 %256
    %258 = vrot.lane.b32.xlu0 %v36, 14
    %v259 = vpop.permute.xlu0 %258
    %vm260 = vcmp.lt.s32.totalorder %v38, 14
    %v261 = vsel %vm260, %v257, %v259
    %v262 = vsel %vm260, %v259, %v257
    %vm263 = vmand %vm177, %vm152
    %vm264 = vmand %vm178, %vm153
    %v265 = vsel %vm263, %v262, 0.0
    %v266 = vsel %vm264, %v261, 0.0
    %s267 = sld [smem:[#allocation2 + $0x9]]
    %v268 = vstv %s267
    %v269 = vmul.f32 %v268, %v265
    %v270 = vmul.f32 %v268, %v266
    %v271 = vadd.f32 %v250, %v269
    %v272 = vadd.f32 %v251, %v270
    %vm273 = vmand %vm263, %vm69
    %vm274 = vmand %vm264, %vm69
    %v275 = vsel %vm273, %v262, -inf
    %v276 = vsel %vm274, %v261, -inf
    %v277 = vmax.f32 %v254, %v275
    %v278 = vmax.f32 %v255, %v276
    %279 = vrot.lane.b32.xlu0 %v35, 2
    %v280 = vpop.permute.xlu0 %279
    %281 = vrot.lane.b32.xlu0 %v36, 2
    %v282 = vpop.permute.xlu0 %281
    %vm283 = vcmp.lt.s32.totalorder %v38, 2
    %v284 = vsel %vm283, %v280, %v282
    %v285 = vsel %vm283, %v282, %v280
    %v286 = vsel %vm56, %v285, 0.0
    %v287 = vsel %vm57, %v284, 0.0
    %s288 = sld [smem:[#allocation2 + $0xa]]
    %v289 = vstv %s288
    %v290 = vmul.f32 %v289, %v286
    %v291 = vmul.f32 %v289, %v287
    %v292 = vadd.f32 %v271, %v290
    %v293 = vadd.f32 %v272, %v291
    %vm294 = vmand %vm56, %vm69
    %vm295 = vmand %vm57, %vm69
    %v296 = vsel %vm294, %v285, -inf
    %v297 = vsel %vm295, %v284, -inf
    %v298 = vmax.f32 %v277, %v296
    %v299 = vmax.f32 %v278, %v297
    %300 = vrot.lane.b32.xlu0 %v35, 1
    %v301 = vpop.permute.xlu0 %300
    %302 = vrot.lane.b32.xlu0 %v36, 1
    %v303 = vpop.permute.xlu0 %302
    %vm304 = vcmp.lt.s32.totalorder %v38, 1
    %v305 = vsel %vm304, %v301, %v303
    %v306 = vsel %vm304, %v303, %v301
    %v307 = vsel %vm81, %v306, 0.0
    %v308 = vsel %vm82, %v305, 0.0
    %s309 = sld [smem:[#allocation2 + $0xb]]
    %v310 = vstv %s309
    %v311 = vmul.f32 %v310, %v307
    %v312 = vmul.f32 %v310, %v308
    %v313 = vadd.f32 %v292, %v311
    %v314 = vadd.f32 %v293, %v312
    %v315 = vsel %vm81, %v306, -inf
    %v316 = vsel %vm82, %v305, -inf
    %v317 = vmax.f32 %v298, %v315
    %v318 = vmax.f32 %v299, %v316
    %s319 = sld [smem:[#allocation2 + $0xc]]
    %v320 = vstv %s319
    %v321 = vmul.f32 %v320, %v35
    %v322 = vmul.f32 %v320, %v36
    %v323 = vadd.f32 %v313, %v321
    %v324 = vadd.f32 %v314, %v322
    %v325 = vmax.f32 %v317, %v35
    %v326 = vmax.f32 %v318, %v36
    %327 = vrot.lane.b32.xlu0 %v35, 127
    %v328 = vpop.permute.xlu0 %327
    %329 = vrot.lane.b32.xlu0 %v36, 127
    %v330 = vpop.permute.xlu0 %329
    %vm331 = vcmp.lt.s32.totalorder %v38, 127
    %v332 = vsel %vm331, %v328, %v330
    %v333 = vsel %vm331, %v330, %v328
    %v334 = vsel %vm127, %v332, 0.0
    %v335 = vsel %vm128, %v333, 0.0
    %s336 = sld [smem:[#allocation2 + $0xd]]
    %v337 = vstv %s336
    %v338 = vmul.f32 %v337, %v334
    %v339 = vmul.f32 %v337, %v335
    %v340 = vadd.f32 %v323, %v338
    %v341 = vadd.f32 %v324, %v339
    %v342 = vsel %vm127, %v332, -inf
    %v343 = vsel %vm128, %v333, -inf
    %v344 = vmax.f32 %v325, %v342
    %v345 = vmax.f32 %v326, %v343
    %346 = vrot.lane.b32.xlu0 %v35, 126
    %v347 = vpop.permute.xlu0 %346
    %348 = vrot.lane.b32.xlu0 %v36, 126
    %v349 = vpop.permute.xlu0 %348
    %vm350 = vcmp.lt.s32.totalorder %v38, 126
    %v351 = vsel %vm350, %v347, %v349
    %v352 = vsel %vm350, %v349, %v347
    %v353 = vsel %vm152, %v351, 0.0
    %v354 = vsel %vm153, %v352, 0.0
    %s355 = sld [smem:[#allocation2 + $0xe]]
    %v356 = vstv %s355
    %v357 = vmul.f32 %v356, %v353
    %v358 = vmul.f32 %v356, %v354
    %v359 = vadd.f32 %v340, %v357
    %v360 = vadd.f32 %v341, %v358
    %vm361 = vmand %vm152, %vm69
    %vm362 = vmand %vm153, %vm69
    %v363 = vsel %vm361, %v351, -inf
    %v364 = vsel %vm362, %v352, -inf
    %v365 = vmax.f32 %v344, %v363
    %v366 = vmax.f32 %v345, %v364
    %367 = vrot.lane.b32.xlu0 %v35, 114
    %v368 = vpop.permute.xlu0 %367
    %369 = vrot.lane.b32.xlu0 %v36, 114
    %v370 = vpop.permute.xlu0 %369
    %vm371 = vcmp.lt.s32.totalorder %v38, 114
    %v372 = vsel %vm371, %v368, %v370
    %v373 = vsel %vm371, %v370, %v368
    %vm374 = vcmp.lt.s32.totalorder %v38, 240
    %vm375 = vcmp.lt.s32.totalorder %v39, 240
    %vm376 = vmand %vm374, %vm56
    %vm377 = vmand %vm375, %vm57
    %v378 = vsel %vm376, %v372, 0.0
    %v379 = vsel %vm377, %v373, 0.0
    %s380 = sld [smem:[#allocation2 + $0xf]]
    %v381 = vstv %s380
    %v382 = vmul.f32 %v381, %v378
    %v383 = vmul.f32 %v381, %v379
    %v384 = vadd.f32 %v359, %v382
    %v385 = vadd.f32 %v360, %v383
    %vm386 = vmand %vm376, %vm69
    %vm387 = vmand %vm377, %vm69
    %v388 = vsel %vm386, %v372, -inf
    %v389 = vsel %vm387, %v373, -inf
    %v390 = vmax.f32 %v365, %v388
    %v391 = vmax.f32 %v366, %v389
    %392 = vrot.lane.b32.xlu0 %v35, 113
    %v393 = vpop.permute.xlu0 %392
    %394 = vrot.lane.b32.xlu0 %v36, 113
    %v395 = vpop.permute.xlu0 %394
    %vm396 = vcmp.lt.s32.totalorder %v38, 113
    %v397 = vsel %vm396, %v393, %v395
    %v398 = vsel %vm396, %v395, %v393
    %vm399 = vmand %vm374, %vm81
    %vm400 = vmand %vm375, %vm82
    %v401 = vsel %vm399, %v397, 0.0
    %v402 = vsel %vm400, %v398, 0.0
    %s403 = sld [smem:[#allocation2 + $0x10]]
    %v404 = vstv %s403
    %v405 = vmul.f32 %v404, %v401
    %v406 = vmul.f32 %v404, %v402
    %v407 = vadd.f32 %v384, %v405
    %v408 = vadd.f32 %v385, %v406
    %v409 = vsel %vm399, %v397, -inf
    %v410 = vsel %vm400, %v398, -inf
    %v411 = vmax.f32 %v390, %v409
    %v412 = vmax.f32 %v391, %v410
    %413 = vrot.lane.b32.xlu0 %v35, 112
    %v414 = vpop.permute.xlu0 %413
    %415 = vrot.lane.b32.xlu0 %v36, 112
    %v416 = vpop.permute.xlu0 %415
    %vm417 = vcmp.lt.s32.totalorder %v38, 112
    %v418 = vsel %vm417, %v414, %v416
    %v419 = vsel %vm417, %v416, %v414
    %v420 = vsel %vm374, %v418, 0.0
    %v421 = vsel %vm375, %v419, 0.0
    %s422 = sld [smem:[#allocation2 + $0x11]]
    %v423 = vstv %s422
    %v424 = vmul.f32 %v423, %v420
    %v425 = vmul.f32 %v423, %v421
    %v426 = vadd.f32 %v407, %v424
    %v427 = vadd.f32 %v408, %v425
    %v428 = vsel %vm374, %v418, -inf
    %v429 = vsel %vm375, %v419, -inf
    %v430 = vmax.f32 %v411, %v428
    %v431 = vmax.f32 %v412, %v429
    %432 = vrot.lane.b32.xlu0 %v35, 111
    %v433 = vpop.permute.xlu0 %432
    %434 = vrot.lane.b32.xlu0 %v36, 111
    %v435 = vpop.permute.xlu0 %434
    %vm436 = vcmp.lt.s32.totalorder %v38, 111
    %v437 = vsel %vm436, %v433, %v435
    %v438 = vsel %vm436, %v435, %v433
    %vm439 = vmand %vm374, %vm127
    %vm440 = vmand %vm375, %vm128
    %v441 = vsel %vm439, %v437, 0.0
    %v442 = vsel %vm440, %v438, 0.0
    %s443 = sld [smem:[#allocation2 + $0x12]]
    %v444 = vstv %s443
    %v445 = vmul.f32 %v444, %v441
    %v446 = vmul.f32 %v444, %v442
    %v447 = vadd.f32 %v426, %v445
    %v448 = vadd.f32 %v427, %v446
    %v449 = vsel %vm439, %v437, -inf
    %v450 = vsel %vm440, %v438, -inf
    %v451 = vmax.f32 %v430, %v449
    %v452 = vmax.f32 %v431, %v450
    %453 = vrot.lane.b32.xlu0 %v35, 110
    %v454 = vpop.permute.xlu0 %453
    %455 = vrot.lane.b32.xlu0 %v36, 110
    %v456 = vpop.permute.xlu0 %455
    %vm457 = vcmp.lt.s32.totalorder %v38, 110
    %v458 = vsel %vm457, %v454, %v456
    %v459 = vsel %vm457, %v456, %v454
    %vm460 = vmand %vm374, %vm152
    %vm461 = vmand %vm375, %vm153
    %v462 = vsel %vm460, %v458, 0.0
    %v463 = vsel %vm461, %v459, 0.0
    %s464 = sld [smem:[#allocation2 + $0x13]]
    %v465 = vstv %s464
    %v466 = vmul.f32 %v465, %v462
    %v467 = vmul.f32 %v465, %v463
    %v468 = vadd.f32 %v447, %v466
    %v469 = vadd.f32 %v448, %v467
    %vm470 = vmand %vm460, %vm69
    %vm471 = vmand %vm461, %vm69
    %v472 = vsel %vm470, %v458, -inf
    %v473 = vsel %vm471, %v459, -inf
    %v474 = vmax.f32 %v451, %v472
    %v475 = vmax.f32 %v452, %v473
    %476 = vrot.lane.b32.xlu0 %v35, 98
    %v477 = vpop.permute.xlu0 %476
    %478 = vrot.lane.b32.xlu0 %v36, 98
    %v479 = vpop.permute.xlu0 %478
    %vm480 = vcmp.lt.s32.totalorder %v38, 98
    %v481 = vsel %vm480, %v477, %v479
    %v482 = vsel %vm480, %v479, %v477
    %vm483 = vcmp.lt.s32.totalorder %v38, 224
    %vm484 = vcmp.lt.s32.totalorder %v39, 224
    %vm485 = vmand %vm483, %vm56
    %vm486 = vmand %vm484, %vm57
    %v487 = vsel %vm485, %v481, 0.0
    %v488 = vsel %vm486, %v482, 0.0
    %s489 = sld [smem:[#allocation2 + $0x14]]
    %v490 = vstv %s489
    %v491 = vmul.f32 %v490, %v487
    %v492 = vmul.f32 %v490, %v488
    %v493 = vadd.f32 %v468, %v491
    %v494 = vadd.f32 %v469, %v492
    %vm495 = vmand %vm485, %vm69
    %vm496 = vmand %vm486, %vm69
    %v497 = vsel %vm495, %v481, -inf
    %v498 = vsel %vm496, %v482, -inf
    %v499 = vmax.f32 %v474, %v497
    %v500 = vmax.f32 %v475, %v498
    %501 = vrot.lane.b32.xlu0 %v35, 97
    %v502 = vpop.permute.xlu0 %501
    %503 = vrot.lane.b32.xlu0 %v36, 97
    %v504 = vpop.permute.xlu0 %503
    %vm505 = vcmp.lt.s32.totalorder %v38, 97
    %v506 = vsel %vm505, %v502, %v504
    %v507 = vsel %vm505, %v504, %v502
    %vm508 = vmand %vm483, %vm81
    %vm509 = vmand %vm484, %vm82
    %v510 = vsel %vm508, %v506, 0.0
    %v511 = vsel %vm509, %v507, 0.0
    %s512 = sld [smem:[#allocation2 + $0x15]]
    %v513 = vstv %s512
    %v514 = vmul.f32 %v513, %v510
    %v515 = vmul.f32 %v513, %v511
    %v516 = vadd.f32 %v493, %v514
    %v517 = vadd.f32 %v494, %v515
    %vm518 = vmand %vm508, %vm69
    %vm519 = vmand %vm509, %vm69
    %v520 = vsel %vm518, %v506, -inf
    %v521 = vsel %vm519, %v507, -inf
    %v522 = vmax.f32 %v499, %v520
    %v523 = vmax.f32 %v500, %v521
    %524 = vrot.lane.b32.xlu0 %v35, 96
    %v525 = vpop.permute.xlu0 %524
    %526 = vrot.lane.b32.xlu0 %v36, 96
    %v527 = vpop.permute.xlu0 %526
    %vm528 = vcmp.lt.s32.totalorder %v38, 96
    %v529 = vsel %vm528, %v525, %v527
    %v530 = vsel %vm528, %v527, %v525
    %v531 = vsel %vm483, %v529, 0.0
    %v532 = vsel %vm484, %v530, 0.0
    %s533 = sld [smem:[#allocation2 + $0x16]]
    %v534 = vstv %s533
    %v535 = vmul.f32 %v534, %v531
    %v536 = vmul.f32 %v534, %v532
    %v537 = vadd.f32 %v516, %v535
    %v538 = vadd.f32 %v517, %v536
    %vm539 = vmand %vm483, %vm69
    %vm540 = vmand %vm484, %vm69
    %v541 = vsel %vm539, %v529, -inf
    %v542 = vsel %vm540, %v530, -inf
    %v543 = vmax.f32 %v522, %v541
    %v544 = vmax.f32 %v523, %v542
    %545 = vrot.lane.b32.xlu0 %v35, 95
    %v546 = vpop.permute.xlu0 %545
    %547 = vrot.lane.b32.xlu0 %v36, 95
    %v548 = vpop.permute.xlu0 %547
    %vm549 = vcmp.lt.s32.totalorder %v38, 95
    %v550 = vsel %vm549, %v546, %v548
    %v551 = vsel %vm549, %v548, %v546
    %vm552 = vmand %vm483, %vm127
    %vm553 = vmand %vm484, %vm128
    %v554 = vsel %vm552, %v550, 0.0
    %v555 = vsel %vm553, %v551, 0.0
    %s556 = sld [smem:[#allocation2 + $0x17]]
    %v557 = vstv %s556
    %v558 = vmul.f32 %v557, %v554
    %v559 = vmul.f32 %v557, %v555
    %v560 = vadd.f32 %v537, %v558
    %v561 = vadd.f32 %v538, %v559
    %vm562 = vmand %vm552, %vm69
    %vm563 = vmand %vm553, %vm69
    %v564 = vsel %vm562, %v550, -inf
    %v565 = vsel %vm563, %v551, -inf
    %v566 = vmax.f32 %v543, %v564
    %v567 = vmax.f32 %v544, %v565
    %568 = vrot.lane.b32.xlu0 %v35, 94
    %v569 = vpop.permute.xlu0 %568
    %570 = vrot.lane.b32.xlu0 %v36, 94
    %v571 = vpop.permute.xlu0 %570
    %vm572 = vcmp.lt.s32.totalorder %v38, 94
    %v573 = vsel %vm572, %v569, %v571
    %v574 = vsel %vm572, %v571, %v569
    %vm575 = vmand %vm483, %vm152
    %vm576 = vmand %vm484, %vm153
    %v577 = vsel %vm575, %v573, 0.0
    %v578 = vsel %vm576, %v574, 0.0
    %s579 = sld [smem:[#allocation2 + $0x18]]
    %v580 = vstv %s579
    %v581 = vmul.f32 %v580, %v577
    %v582 = vmul.f32 %v580, %v578
    %v583 = vadd.f32 %v560, %v581
    %v584 = vadd.f32 %v561, %v582
    %vm585 = vmand %vm575, %vm69
    %vm586 = vmand %vm576, %vm69
    %v587 = vsel %vm585, %v573, -inf
    %v588 = vsel %vm586, %v574, -inf
    %v589 = vmax.f32 %v566, %v587
    %v590 = vmax.f32 %v567, %v588
    %s591 = sld [smem:[#allocation2 + $0x19]]
    %s592 = sld [smem:[#allocation2 + $0x1a]]
    %s593 = sld [smem:[#allocation2 + $0x1b]]
    %v594 = vstv %s591
    %v595 = vadd.f32 %v583, %v594
    %v596 = vadd.f32 %v584, %v594
    %v597 = vstv %s592
    %v598 = vmul.f32 %v597, %v589
    %v599 = vmul.f32 %v597, %v590
    %v602 = vrot.slane %v598, 2
    %v603 = vrot.slane %v599, 2
    %v606 = vadd.f32 %v595, %v602
    %v607 = vadd.f32 %v596, %v603
    %v608 = vstv %s593
    %v609 = vmul.f32 %v608, %v589
    %v610 = vmul.f32 %v608, %v590
    %v613 = vrot.slane %v609, 4
    %v614 = vrot.slane %v610, 4
    %v617 = vadd.f32 %v606, %v613
    %v618 = vadd.f32 %v607, %v614
    %v621 = vcombine.low %v617, %v618
    %v623 = vunpack.c.l.s4 1983009808
    %v624 = vunpack.c.0.s8 %v623
    %v625 = vlaneseq
    %v626 = vshrl.u32 %v625, 7
    %v627 = vsub.s32 %v624, %v626
    %v628 = vrot.slane %v621, %v627
    %630 = vst [vmem:[#allocation7] sm:$0xf] %v628
    // Predicated region
    $region18: #{tpu_custom_call.1} parent=1 // pred_check
      _
    $region19: #{tpu_custom_call.1} parent=1 // pred_check_branch
      %632 = sbr.rel (0) target = $region21
    $region20: #{tpu_custom_call.1} parent=1 // pred_region
      %s634 = ssub.s32 64, 64
      %635 = vsyncadd [#allocation4], %s634
      %s637 = sshll.u32 [#allocation7], 4
      %s638 = int_to_ptr.vmem [resolvable:$true] %s637
      %640 = dma.vmem_to_hbm [thread:$0]  %s638, 64, %s2, [#allocation4]
    $region21: #{tpu_custom_call.1} parent=1 // pred_fallthru
      _
    // Predicated region
    $region22: #{tpu_custom_call.1} parent=1 // pred_check
      _
    $region23: #{tpu_custom_call.1} parent=1 // pred_check_branch
      %642 = sbr.rel (0) target = $region25
    $region24: #{tpu_custom_call.1} parent=1 // pred_region
      %643 = dma.done [#allocation4], 64
    $region25: #{tpu_custom_call.1} parent=1 // pred_fallthru
      _
    %644 = vsyncpa [#allocation3], 1
    %645 = vsyncpa [#allocation4], 1
    %646 = vsyncpa [#allocation5], 1

</llo_original>
